<compile_context>
chip_gen: v6e
topology: v6e:2x2x1
jax: 0.10.0
libtpu: 0.0.40
codegen_flags: <defaults>
</compile_context>

<pallas_src>
import math

import jax
import jax.numpy as jnp
from jax.experimental import pallas as pl
from jax.experimental.pallas import tpu as pltpu


# ---------------------------------------------------------------------------
# Kernels
# ---------------------------------------------------------------------------
def _pointwise_conv_kernel_mxu(x_ref, w_ref, b_ref, o_ref):
    # x_ref: (1, C_in, TL)   w_ref: (TCO, C_in)   b_ref: (TCO, 1)
    # o_ref: (1, TCO, TL)
    # Native-dtype operands straight to the MXU, f32 accumulation.
    y = jnp.dot(w_ref[...], x_ref[0, :, :], preferred_element_type=jnp.float32)
    y = y + b_ref[...].astype(jnp.float32)
    o_ref[0, :, :] = y.astype(o_ref.dtype)


def _pointwise_conv_kernel_vpu(x_ref, w_ref, b_ref, o_ref):
    # Tiny-C_in path: unrolled broadcast-FMA over channels on the VPU.
    # Avoids a K-starved MXU matmul when C_in is below one sublane group.
    x = x_ref[0, :, :].astype(jnp.float32)          # (C_in, TL)
    w = w_ref[...].astype(jnp.float32)              # (TCO, C_in)
    c_in = w.shape[1]
    y = w[:, 0:1] * x[0:1, :]                       # (TCO, TL) via broadcast
    for c in range(1, c_in):                        # static unroll (C_in small)
        y = y + w[:, c:c + 1] * x[c:c + 1, :]
    y = y + b_ref[...].astype(jnp.float32)
    o_ref[0, :, :] = y.astype(o_ref.dtype)


# ---------------------------------------------------------------------------
# Tiling heuristics
# ---------------------------------------------------------------------------
def _vmem_capacity_bytes() -> int:
    try:
        return int(pltpu.get_tpu_info().vmem_capacity_bytes)
    except Exception:
        return 64 << 20  # v7x per-TC size: the smallest of current generations


def _pick_cout_tile(c_out, c_in, w_bytes, max_cout_tile=None):
    """Keep C_out whole whenever the weight is trivially VMEM-resident."""
    if max_cout_tile is not None and max_cout_tile < c_out:
        cap = max(8, int(max_cout_tile))            # forced tiling (tests / huge layers)
    elif c_out * c_in * w_bytes <= (8 << 20):
        return c_out                                # whole weight resident -> n_co == 1
    else:
        cap = 256
    # cdiv-balanced tiles, aligned to 128 (MXU width) or at least 8 (sublane).
    nblk = pl.cdiv(c_out, cap)
    align = 128 if cap >= 128 else 8
    tco = pl.cdiv(pl.cdiv(c_out, nblk), align) * align
    return min(tco, c_out)


def _pick_length_tile(l_out, c_in, tco, in_bytes, out_bytes, w_bytes, b_bytes,
                      max_l_tile, budget):
    """Largest 128-aligned L tile fitting double-buffered x+out in `budget`."""
    resident = 2 * tco * (c_in * w_bytes + b_bytes)       # weight + bias blocks
    avail = max(4 << 20, budget - resident)
    per_col = 2 * (c_in * in_bytes + tco * out_bytes)     # double-buffered x + out
    fit = max(128, avail // per_col)
    cap = min(int(max_l_tile), int(fit))
    if l_out <= cap:
        return l_out                                      # full dim: always legal
    return max(128, (cap // 128) * 128)                   # lane-aligned tile


# ---------------------------------------------------------------------------
# Wrapper
# ---------------------------------------------------------------------------
def pointwise_conv1d(x, weight, bias=None, *, stride: int = 1, padding: int = 0,
                     max_l_tile: int = 4096, max_cout_tile=None):
    """x: (N, C_in, L), weight: (C_out, C_in), bias: (C_out,) -> (N, C_out, L_out)."""
    n, c_in, _ = x.shape
    c_out = weight.shape[0]
    if bias is None:
        bias = jnp.zeros((c_out,), dtype=x.dtype)

    # Stride / padding glue (defaults 1 / 0 -> no-op).  See TODO(synk) above.
    if padding > 0:
        x = jnp.pad(x, ((0, 0), (0, 0), (padding, padding)))
    if stride > 1:
        x = x[:, :, ::stride]
    l_out = x.shape[2]

    out_dtype = x.dtype
    in_bytes = int(x.dtype.itemsize)
    out_bytes = int(jnp.dtype(out_dtype).itemsize)
    w_bytes = int(weight.dtype.itemsize)
    b_bytes = int(bias.dtype.itemsize)

    vmem_cap = _vmem_capacity_bytes()
    # Tile budget: ~56 MiB on v5e/v6e (128 MiB VMEM), ~48 MiB on v7x (64 MiB/TC),
    # always leaving >=16 MiB of headroom for Mosaic internal scratch.
    tile_budget = max(16 << 20, min(vmem_cap - (16 << 20), 56 << 20))

    tco = _pick_cout_tile(c_out, c_in, w_bytes, max_cout_tile)
    tl = _pick_length_tile(l_out, c_in, tco, in_bytes, out_bytes, w_bytes, b_bytes,
                           max_l_tile, tile_budget)
    n_co = pl.cdiv(c_out, tco)
    n_l = pl.cdiv(l_out, tl)

    bias2d = bias.reshape(c_out, 1)

    # ---- Grid ordering: minimize redundant HBM traffic when n_co > 1. ------
    x_total = n * c_in * l_out * in_bytes
    w_total = c_out * c_in * w_bytes
    b_total = c_out * b_bytes
    o_total = n * c_out * l_out * out_bytes
    # Option A: co outermost -> weight read once, x streamed n_co times.
    traffic_a = x_total * n_co + w_total + b_total + o_total
    # Option B: co innermost -> x streamed once, weight read n*n_l times.
    traffic_b = x_total + (w_total + b_total) * n * n_l + o_total

    if traffic_a <= traffic_b:
        grid = (n_co, n, n_l)
        x_spec = pl.BlockSpec((1, c_in, tl), lambda co, b, lb: (b, 0, lb))
        w_spec = pl.BlockSpec((tco, c_in), lambda co, b, lb: (co, 0))
        b_spec = pl.BlockSpec((tco, 1), lambda co, b, lb: (co, 0))
        o_spec = pl.BlockSpec((1, tco, tl), lambda co, b, lb: (b, co, lb))
        bytes_accessed = traffic_a
    else:
        grid = (n, n_l, n_co)
        x_spec = pl.BlockSpec((1, c_in, tl), lambda b, lb, co: (b, 0, lb))
        w_spec = pl.BlockSpec((tco, c_in), lambda b, lb, co: (co, 0))
        b_spec = pl.BlockSpec((tco, 1), lambda b, lb, co: (co, 0))
        o_spec = pl.BlockSpec((1, tco, tl), lambda b, lb, co: (b, co, lb))
        bytes_accessed = traffic_b

    # ---- VMEM accounting / compiler params ---------------------------------
    est_vmem = (2 * c_in * tl * in_bytes          # double-buffered x tiles
                + 2 * tco * tl * out_bytes        # double-buffered out tiles
                + 2 * tco * c_in * w_bytes        # weight block
                + 2 * tco * b_bytes)              # bias block
    vmem_limit = int(max(32 << 20, min(est_vmem + (4 << 20), vmem_cap - (8 << 20))))

    cost = pl.CostEstimate(
        flops=2 * n * c_out * c_in * l_out,
        transcendentals=0,
        bytes_accessed=int(bytes_accessed),
    )

    # Tiny-C_in: below one packed sublane group the MXU is K-starved; use VPU.
    sublane_group = max(1, 32 // in_bytes)        # 8 for f32, 16 for bf16
    kernel = (_pointwise_conv_kernel_vpu if c_in < sublane_group
              else _pointwise_conv_kernel_mxu)

    return pl.pallas_call(
        kernel,
        out_shape=jax.ShapeDtypeStruct((n, c_out, l_out), out_dtype),
        grid_spec=pltpu.PrefetchScalarGridSpec(
            num_scalar_prefetch=0,
            grid=grid,
            in_specs=[x_spec, w_spec, b_spec],
            out_specs=o_spec,
        ),
        compiler_params=pltpu.CompilerParams(
            # No reduction axis -> every axis is parallel (v7x megacore can
            # shard any of them).
            dimension_semantics=("parallel", "parallel", "parallel"),
            vmem_limit_bytes=vmem_limit,
        ),
        cost_estimate=cost,
    )(x, weight, bias2d)


# ---------------------------------------------------------------------------
# Reference & self-test
# ---------------------------------------------------------------------------
def _reference(x, weight, bias, stride=1, padding=0):
    if padding > 0:
        x = jnp.pad(x, ((0, 0), (0, 0), (padding, padding)))
    if stride > 1:
        x = x[:, :, ::stride]
    y = jnp.einsum("ncl,oc->nol", x.astype(jnp.float32), weight.astype(jnp.float32))
    return y + bias.astype(jnp.float32)[None, :, None]


if __name__ == "__main__":
    key = jax.random.PRNGKey(0)
    k_x, k_w, k_b, k_x2, k_w2, k_b2, k_x3 = jax.random.split(key, 7)

    # ---- 1) module-consistent small shapes: f32, stride=1, padding=0 -------
    batch, in_channels, out_channels, length = 2, 4, 8, 16
    fan_in = in_channels * 1  # kernel_size = 1  (nn.Conv1d default init bounds)
    w_bound = math.sqrt(1.0 / fan_in) * math.sqrt(3.0)
    b_bound = math.sqrt(1.0 / fan_in)
    weight = jax.random.uniform(
        k_w, (out_channels, in_channels), jnp.float32, -w_bound, w_bound)
    bias = jax.random.uniform(k_b, (out_channels,), jnp.float32, -b_bound, b_bound)
    x = jax.random.normal(k_x, (batch, in_channels, length), jnp.float32)

    out = jax.block_until_ready(pointwise_conv1d(x, weight, bias))
    ref = _reference(x, weight, bias)
    assert out.shape == (batch, out_channels, length), out.shape
    assert jnp.allclose(out, ref, atol=1e-5, rtol=1e-5), "f32 mismatch vs reference"

    # ---- 2) ragged L tiling (forced 128 tile) + stride + padding -----------
    x2 = jax.random.normal(k_x2, (batch, in_channels, 300), jnp.float32)
    out2 = jax.block_until_ready(
        pointwise_conv1d(x2, weight, bias, stride=2, padding=1, max_l_tile=128))
    ref2 = _reference(x2, weight, bias, stride=2, padding=1)
    assert out2.shape == ref2.shape, (out2.shape, ref2.shape)
    assert jnp.allclose(out2, ref2, atol=1e-5, rtol=1e-5), "ragged/strided mismatch"

    # ---- 3) MXU path + ragged C_out (forced tiling) + traffic-driven grid --
    ci3, co3, l3 = 32, 20, 256
    w3 = jax.random.uniform(k_w2, (co3, ci3), jnp.float32,
                            -math.sqrt(3.0 / ci3), math.sqrt(3.0 / ci3))
    b3 = jax.random.uniform(k_b2, (co3,), jnp.float32,
                            -math.sqrt(1.0 / ci3), math.sqrt(1.0 / ci3))
    x3 = jax.random.normal(k_x3, (batch, ci3, l3), jnp.float32)
    out3 = jax.block_until_ready(pointwise_conv1d(x3, w3, b3, max_cout_tile=8))
    ref3 = _reference(x3, w3, b3)
    assert out3.shape == ref3.shape, (out3.shape, ref3.shape)
    assert jnp.allclose(out3, ref3, atol=1e-5, rtol=1e-5), "ragged C_out mismatch"

    # ---- 4) bf16 I/O on the MXU bf16 path (f32 accumulation) ---------------
    xb = x3[:, :, :128].astype(jnp.bfloat16)
    wb = w3.astype(jnp.bfloat16)
    bb = b3.astype(jnp.bfloat16)
    out4 = jax.block_until_ready(pointwise_conv1d(xb, wb, bb))
    ref4 = _reference(xb.astype(jnp.float32), wb.astype(jnp.float32),
                      bb.astype(jnp.float32))
    assert jnp.allclose(out4.astype(jnp.float32), ref4, atol=5e-2, rtol=5e-2), \
        "bf16 mismatch vs reference"

    print("KERNEL_OK")
</pallas_src>

<mosaic_0001>
module attributes {stable_mosaic.version = 11 : i64} {
  func.func @_pointwise_conv_kernel_vpu(%arg0: i32, %arg1: i32, %arg2: i32, %arg3: memref<1x4x16xf32, #tpu.memory_space<vmem>>, %arg4: memref<8x4xf32, #tpu.memory_space<vmem>>, %arg5: memref<8x1xf32, #tpu.memory_space<vmem>>, %arg6: memref<1x8x16xf32, #tpu.memory_space<vmem>>) attributes {dimension_semantics = [#tpu.dimension_semantics<parallel>, #tpu.dimension_semantics<parallel>, #tpu.dimension_semantics<parallel>], iteration_bounds = array<i64: 1, 2, 1>, scalar_prefetch = 0 : i64, scratch_operands = 0 : i64, tpu.core_type = #tpu.core_type<tc>, window_params = [{transform_indices = @transform_0, window_bounds = array<i64: 1, 4, 16>}, {transform_indices = @transform_1, window_bounds = array<i64: 8, 4>}, {transform_indices = @transform_2, window_bounds = array<i64: 8, 1>}, {transform_indices = @transform_3, window_bounds = array<i64: 1, 8, 16>}]} {
    %c0 = arith.constant 0 : index
    %c0_0 = arith.constant 0 : index
    %c0_1 = arith.constant 0 : index
    %0 = vector.load %arg3[%c0, %c0_0, %c0_1] : memref<1x4x16xf32, #tpu.memory_space<vmem>>, vector<1x4x16xf32>
    %1 = vector.shape_cast %0 : vector<1x4x16xf32> to vector<4x16xf32>
    %c0_2 = arith.constant 0 : index
    %c0_3 = arith.constant 0 : index
    %2 = vector.load %arg4[%c0_2, %c0_3] : memref<8x4xf32, #tpu.memory_space<vmem>>, vector<8x4xf32>
    %3 = vector.extract_strided_slice %2 {offsets = [0, 0], sizes = [8, 1], strides = [1, 1]} : vector<8x4xf32> to vector<8x1xf32>
    %4 = vector.extract_strided_slice %1 {offsets = [0, 0], sizes = [1, 16], strides = [1, 1]} : vector<4x16xf32> to vector<1x16xf32>
    %5 = vector.broadcast %3 : vector<8x1xf32> to vector<8x16xf32>
    %6 = vector.broadcast %4 : vector<1x16xf32> to vector<8x16xf32>
    %7 = arith.mulf %5, %6 : vector<8x16xf32>
    %8 = vector.extract_strided_slice %2 {offsets = [0, 1], sizes = [8, 1], strides = [1, 1]} : vector<8x4xf32> to vector<8x1xf32>
    %9 = vector.extract_strided_slice %1 {offsets = [1, 0], sizes = [1, 16], strides = [1, 1]} : vector<4x16xf32> to vector<1x16xf32>
    %10 = vector.broadcast %8 : vector<8x1xf32> to vector<8x16xf32>
    %11 = vector.broadcast %9 : vector<1x16xf32> to vector<8x16xf32>
    %12 = arith.mulf %10, %11 : vector<8x16xf32>
    %13 = arith.addf %7, %12 : vector<8x16xf32>
    %14 = vector.extract_strided_slice %2 {offsets = [0, 2], sizes = [8, 1], strides = [1, 1]} : vector<8x4xf32> to vector<8x1xf32>
    %15 = vector.extract_strided_slice %1 {offsets = [2, 0], sizes = [1, 16], strides = [1, 1]} : vector<4x16xf32> to vector<1x16xf32>
    %16 = vector.broadcast %14 : vector<8x1xf32> to vector<8x16xf32>
    %17 = vector.broadcast %15 : vector<1x16xf32> to vector<8x16xf32>
    %18 = arith.mulf %16, %17 : vector<8x16xf32>
    %19 = arith.addf %13, %18 : vector<8x16xf32>
    %20 = vector.extract_strided_slice %2 {offsets = [0, 3], sizes = [8, 1], strides = [1, 1]} : vector<8x4xf32> to vector<8x1xf32>
    %21 = vector.extract_strided_slice %1 {offsets = [3, 0], sizes = [1, 16], strides = [1, 1]} : vector<4x16xf32> to vector<1x16xf32>
    %22 = vector.broadcast %20 : vector<8x1xf32> to vector<8x16xf32>
    %23 = vector.broadcast %21 : vector<1x16xf32> to vector<8x16xf32>
    %24 = arith.mulf %22, %23 : vector<8x16xf32>
    %25 = arith.addf %19, %24 : vector<8x16xf32>
    %c0_4 = arith.constant 0 : index
    %c0_5 = arith.constant 0 : index
    %26 = vector.load %arg5[%c0_4, %c0_5] : memref<8x1xf32, #tpu.memory_space<vmem>>, vector<8x1xf32>
    %27 = vector.broadcast %26 : vector<8x1xf32> to vector<8x16xf32>
    %28 = arith.addf %25, %27 : vector<8x16xf32>
    %c0_6 = arith.constant 0 : index
    %c0_7 = arith.constant 0 : index
    %c0_8 = arith.constant 0 : index
    %29 = vector.load %arg6[%c0_6, %c0_7, %c0_8] : memref<1x8x16xf32, #tpu.memory_space<vmem>>, vector<1x8x16xf32>
    %30 = vector.shape_cast %29 : vector<1x8x16xf32> to vector<8x16xf32>
    %31 = vector.shape_cast %28 : vector<8x16xf32> to vector<1x8x16xf32>
    tpu.vector_store %arg6[%c0_6, %c0_7, %c0_8], %31 {strides = array<i32>} : memref<1x8x16xf32, #tpu.memory_space<vmem>>, vector<1x8x16xf32>,
    return
  }
  func.func @transform_0(%arg0: i32, %arg1: i32, %arg2: i32) -> (i32, i32, i32) {
    %c0_i32 = arith.constant 0 : i32
    %c0_i32_0 = arith.constant 0 : i32
    return %arg1, %c0_i32, %arg2 : i32, i32, i32
  }
  func.func @transform_1(%arg0: i32, %arg1: i32, %arg2: i32) -> (i32, i32) {
    %c0_i32 = arith.constant 0 : i32
    %c0_i32_0 = arith.constant 0 : i32
    return %arg0, %c0_i32 : i32, i32
  }
  func.func @transform_2(%arg0: i32, %arg1: i32, %arg2: i32) -> (i32, i32) {
    %c0_i32 = arith.constant 0 : i32
    %c0_i32_0 = arith.constant 0 : i32
    return %arg0, %c0_i32 : i32, i32
  }
  func.func @transform_3(%arg0: i32, %arg1: i32, %arg2: i32) -> (i32, i32, i32) {
    %c0_i32 = arith.constant 0 : i32
    return %arg1, %arg0, %arg2 : i32, i32, i32
  }
}

</mosaic_0001>

<llo_original>
// kernel: tpu_custom_call.1
$region0: #{tpu_custom_call.1}
  #allocation0 [shape = 'u32[]', space=smem, size = 0x4, offset = 0x4, fixed_abs, tag = 'smem constant byte address 0x4 - core index']
  #allocation1 [shape = 'u32[144,128]{1,0:T(1,128)}', space=vmem, size = 0x12000, scoped, tag = 'internal scratch']
  %s0 = inlined_call_operand.vmem [shape: f32[2,4,16], index: 0, kind: input, shape index: {}]
  %s1 = inlined_call_operand.vmem [shape: f32[8,4], index: 1, kind: input, shape index: {}]
  %s2 = inlined_call_operand.vmem [shape: f32[8,1], index: 2, kind: input, shape index: {}]
  %s3 = inlined_call_operand.hbm [shape: f32[2,8,16], index: 3, kind: output, shape index: {}]
  %s4 = sld [smem:[#allocation0]]
  $region45: #{tpu_custom_call.1} parent=0
    _
  %s6 = ssub.s32 1, %s4
  %s7 = scalar_select 0, %s6, %s4
  $region1: #{tpu_custom_call.1} parent=0
    #allocation2 [shape = 'u8[8192]{0}', space=vmem, size = 0x2000, scoped, tag = 'output window, operand 0']
    #allocation3 [shape = 's32[2]{0}', space=sflag, size = 0x8, scoped, tag = 'scoped memory for tpu_custom_call.1']
    %8 = vsyncpa [#allocation3], 0
    %s9 = scalar_lea.sflag [#allocation3], 1
    %10 = vsyncpa %s9, 0
    loop: start=0, step=1, limit=4
    $region2: #{tpu_custom_call.1} parent=1 // loop_pre_header
      _
    $region3: #{tpu_custom_call.1} parent=1 // loop_header
      %s12 = sphi 0, %s16
      %p13 = scmp.ge.s32.totalorder %s12, 4
      %s19 = sphi 0, %s38
      %s20 = sphi 0, %s34
      %s21 = sphi 0, %s30
      %s22 = sphi 0, %s19
      %s23 = sphi 0, %s20
      %s24 = sphi 0, %s21
      %s25 = sphi 0, %s22
      %s26 = sphi 0, %s23
      %s27 = sphi 0, %s24
      %s43 = sphi 0, %s45
      %s46 = sphi 0, %s43
      %s47 = sphi 0, %s46
      %s63 = sphi 0, %s47
      %s69 = sphi 0, %s71
      %s72 = sphi 0, %s69
      %s73 = sphi 0, %s72
      %s89 = sphi 0, %s73
      %s95 = sphi 0, %s97
      %s98 = sphi 0, %s95
      %s99 = sphi 0, %s98
      %s115 = sphi 0, %s99
      %s125 = sphi 0, %s127
      %s128 = sphi 0, %s125
      %s129 = sphi 0, %s128
      %s145 = sphi 0, %s129
    $region4: #{tpu_custom_call.1} parent=1 // loop_header_branch
      %15 = sbr.rel (%p13) target = $region8
    $region5: #{tpu_custom_call.1} parent=1 // loop_body
      %s17 = ssub.s32 %s12, 1
      %s18 = ssub.s32 %s12, 2
      %s28 = sadd.s32 1, %s21
      %p29 = scmp.ge.s32.totalorder %s28, 1
      %s30 = scalar_select %p29, 0, %s28
      %s31 = sadd.s32 1, %s20
      %s32 = scalar_select %p29, %s31, %s20
      %p33 = scmp.ge.s32.totalorder %s32, 2
      %s34 = scalar_select %p33, 0, %s32
      %s35 = sadd.s32 1, %s19
      %s36 = scalar_select %p33, %s35, %s19
      %p37 = scmp.ge.s32.totalorder %s36, 1
      %s38 = scalar_select %p37, 0, %s36
      %s39 = ssub.s32 %s20, %s34
      %s40 = ssub.s32 %s21, %s30
      %s41 = sor.u32 %s39, %s40
      %p42 = scmp.eq.s32.totalorder %s41, 0
      %s44 = sadd.s32 %s43, 1
      %s45 = scalar_select %p42, %s43, %s44
      %p48 = pneg %p42
      %p49 = scmp.eq.s32.totalorder %s12, 1
      %p50 = por %p48, %p49
      %p51 = scmp.ne.s32.totalorder %s43, %s46
      %p52 = scmp.eq.s32.totalorder %s12, 0
      %p53 = por %p51, %p52
      %p54 = scmp.ne.s32.totalorder %s43, %s46
      %p55 = scmp.eq.s32.totalorder %s17, 1
      %p56 = por %p54, %p55
      %p57 = scmp.ne.s32.totalorder %s46, %s47
      %p58 = scmp.eq.s32.totalorder %s17, 0
      %p59 = por %p57, %p58
      %p60 = scmp.ne.s32.totalorder %s46, %s47
      %p61 = scmp.eq.s32.totalorder %s18, 1
      %p62 = por %p60, %p61
      %p64 = scmp.ne.s32.totalorder %s47, %s63
      %p65 = scmp.eq.s32.totalorder %s18, 0
      %p66 = por %p64, %p65
      %s67 = ssub.s32 %s19, %s38
      %p68 = scmp.eq.s32.totalorder %s67, 0
      %s70 = sadd.s32 %s69, 1
      %s71 = scalar_select %p68, %s69, %s70
      %p74 = pneg %p68
      %p75 = scmp.eq.s32.totalorder %s12, 1
      %p76 = por %p74, %p75
      %p77 = scmp.ne.s32.totalorder %s69, %s72
      %p78 = scmp.eq.s32.totalorder %s12, 0
      %p79 = por %p77, %p78
      %p80 = scmp.ne.s32.totalorder %s69, %s72
      %p81 = scmp.eq.s32.totalorder %s17, 1
      %p82 = por %p80, %p81
      %p83 = scmp.ne.s32.totalorder %s72, %s73
      %p84 = scmp.eq.s32.totalorder %s17, 0
      %p85 = por %p83, %p84
      %p86 = scmp.ne.s32.totalorder %s72, %s73
      %p87 = scmp.eq.s32.totalorder %s18, 1
      %p88 = por %p86, %p87
      %p90 = scmp.ne.s32.totalorder %s73, %s89
      %p91 = scmp.eq.s32.totalorder %s18, 0
      %p92 = por %p90, %p91
      %s93 = ssub.s32 %s19, %s38
      %p94 = scmp.eq.s32.totalorder %s93, 0
      %s96 = sadd.s32 %s95, 1
      %s97 = scalar_select %p94, %s95, %s96
      %p100 = pneg %p94
      %p101 = scmp.eq.s32.totalorder %s12, 1
      %p102 = por %p100, %p101
      %p103 = scmp.ne.s32.totalorder %s95, %s98
      %p104 = scmp.eq.s32.totalorder %s12, 0
      %p105 = por %p103, %p104
      %p106 = scmp.ne.s32.totalorder %s95, %s98
      %p107 = scmp.eq.s32.totalorder %s17, 1
      %p108 = por %p106, %p107
      %p109 = scmp.ne.s32.totalorder %s98, %s99
      %p110 = scmp.eq.s32.totalorder %s17, 0
      %p111 = por %p109, %p110
      %p112 = scmp.ne.s32.totalorder %s98, %s99
      %p113 = scmp.eq.s32.totalorder %s18, 1
      %p114 = por %p112, %p113
      %p116 = scmp.ne.s32.totalorder %s99, %s115
      %p117 = scmp.eq.s32.totalorder %s18, 0
      %p118 = por %p116, %p117
      %s119 = ssub.s32 %s20, %s34
      %s120 = ssub.s32 %s19, %s38
      %s121 = sor.u32 %s119, %s120
      %s122 = ssub.s32 %s21, %s30
      %s123 = sor.u32 %s121, %s122
      %p124 = scmp.eq.s32.totalorder %s123, 0
      %s126 = sadd.s32 %s125, 1
      %s127 = scalar_select %p124, %s125, %s126
      %p130 = pneg %p124
      %p131 = scmp.eq.s32.totalorder %s12, 1
      %p132 = por %p130, %p131
      %p133 = scmp.ne.s32.totalorder %s125, %s128
      %p134 = scmp.eq.s32.totalorder %s12, 0
      %p135 = por %p133, %p134
      %p136 = scmp.ne.s32.totalorder %s125, %s128
      %p137 = scmp.eq.s32.totalorder %s17, 1
      %p138 = por %p136, %p137
      %p139 = scmp.ne.s32.totalorder %s128, %s129
      %p140 = scmp.eq.s32.totalorder %s17, 0
      %p141 = por %p139, %p140
      %p142 = scmp.ne.s32.totalorder %s128, %s129
      %p143 = scmp.eq.s32.totalorder %s18, 1
      %p144 = por %p142, %p143
      %p146 = scmp.ne.s32.totalorder %s129, %s145
      %p147 = scmp.eq.s32.totalorder %s18, 0
      %p148 = por %p146, %p147
      %p149 = scmp.le.s32.totalorder 1, %s12
      %p150 = scmp.lt.s32.totalorder %s12, 3
      %p151 = pnand %p149, %p150
      %p152 = pneg %p151
      // Predicated region
      $region9: #{tpu_custom_call.1} parent=5 // pred_check
        _
      $region10: #{tpu_custom_call.1} parent=5 // pred_check_branch
        %154 = sbr.rel (%p151) target = $region12
      $region11: #{tpu_custom_call.1} parent=5 // pred_region
        %s155 = ssub.s32 %s12, 1
        // Predicated region
        $region13: #{tpu_custom_call.1} parent=11 // pred_check
          %p156 = pneg %p85
        $region14: #{tpu_custom_call.1} parent=11 // pred_check_branch
          %158 = sbr.rel (%p156) target = $region16
        $region15: #{tpu_custom_call.1} parent=11 // pred_region
          %p159 = scmp.lt.s32.totalorder %s22, 0
          %s160 = scalar_select %p159, %s22, 0
          %s161 = smul.addr %s160, 8
          %s162 = scalar_lea.vmem %s1, %s161
        $region16: #{tpu_custom_call.1} parent=11 // pred_fallthru
          _
        // Predicated region
        $region17: #{tpu_custom_call.1} parent=11 // pred_check
          %p163 = pneg %p111
        $region18: #{tpu_custom_call.1} parent=11 // pred_check_branch
          %165 = sbr.rel (%p163) target = $region20
        $region19: #{tpu_custom_call.1} parent=11 // pred_region
          %p166 = scmp.lt.s32.totalorder %s22, 0
          %s167 = scalar_select %p166, %s22, 0
          %s168 = smul.addr %s167, 8
          %s169 = scalar_lea.vmem %s2, %s168
        $region20: #{tpu_custom_call.1} parent=11 // pred_fallthru
          _
      $region12: #{tpu_custom_call.1} parent=5 // pred_fallthru
        _
      %p170 = scmp.lt.s32.totalorder %s12, 2
      // Predicated region
      $region21: #{tpu_custom_call.1} parent=5 // pred_check
        %p171 = pneg %p170
      $region22: #{tpu_custom_call.1} parent=5 // pred_check_branch
        %173 = sbr.rel (%p171) target = $region24
      $region23: #{tpu_custom_call.1} parent=5 // pred_region
        // Predicated region
        $region25: #{tpu_custom_call.1} parent=23 // pred_check
          %p174 = pneg %p53
        $region26: #{tpu_custom_call.1} parent=23 // pred_check_branch
          %176 = sbr.rel (%p174) target = $region28
        $region27: #{tpu_custom_call.1} parent=23 // pred_region
          %p177 = scmp.lt.s32.totalorder %s20, 1
          %s178 = scalar_select %p177, %s20, 1
          %p179 = scmp.lt.s32.totalorder %s21, 0
          %s180 = scalar_select %p179, %s21, 0
          %s181 = sadd.s32 %s180, %s178
          %s182 = smul.addr %s181, 4
          %s183 = scalar_lea.vmem %s0, %s182
        $region28: #{tpu_custom_call.1} parent=23 // pred_fallthru
          _
      $region24: #{tpu_custom_call.1} parent=5 // pred_fallthru
        _
      %p184 = scmp.le.s32.totalorder 1, %s12
      %p185 = scmp.lt.s32.totalorder %s12, 3
      %p186 = pnand %p184, %p185
      %p187 = pneg %p186
      // Predicated region
      $region29: #{tpu_custom_call.1} parent=5 // pred_check
        _
      $region30: #{tpu_custom_call.1} parent=5 // pred_check_branch
        %189 = sbr.rel (%p186) target = $region32
      $region31: #{tpu_custom_call.1} parent=5 // pred_region
        %s190 = ssub.s32 %s12, 1
        %p191 = scmp.lt.s32.totalorder %s23, 1
        %s192 = scalar_select %p191, %s23, 1
        %p193 = scmp.lt.s32.totalorder %s24, 0
        %s194 = scalar_select %p193, %s24, 0
        %s195 = sadd.s32 %s194, %s192
        %s196 = smul.addr %s195, 4
        %s197 = scalar_lea.vmem %s0, %s196
        %p198 = pneg %p59
        %p199 = pneg %p56
        %p200 = scmp.lt.s32.totalorder %s22, 0
        %s201 = scalar_select %p200, %s22, 0
        %s202 = smul.addr %s201, 8
        %s203 = scalar_lea.vmem %s1, %s202
        %p204 = pneg %p85
        %p205 = pneg %p82
        %p206 = scmp.lt.s32.totalorder %s22, 0
        %s207 = scalar_select %p206, %s22, 0
        %s208 = smul.addr %s207, 8
        %s209 = scalar_lea.vmem %s2, %s208
        %p210 = pneg %p111
        %p211 = pneg %p108
        %p212 = pneg %p141
        %p213 = pneg %p138
        %s214 = sand.u32 %s128, 1
        %s215 = scalar_lea.sflag [#allocation3], %s214
        %s216 = sand.u32 %s128, 1
        %s217 = smul.addr %s216, 8
        %s218 = scalar_lea.vmem [#allocation2], %s217
        %p219 = scmp.lt.s32.totalorder %s23, 1
        %s220 = scalar_select %p219, %s23, 1
        %p221 = scmp.lt.s32.totalorder %s24, 0
        %s222 = scalar_select %p221, %s24, 0
        %s223 = sadd.s32 %s222, %s220
        %s224 = smul.addr %s223, 4
        %s225 = scalar_lea.vmem %s0, %s224
        %p226 = scmp.lt.s32.totalorder %s22, 0
        %s227 = scalar_select %p226, %s22, 0
        %s228 = smul.addr %s227, 8
        %s229 = scalar_lea.vmem %s1, %s228
        %p230 = scmp.lt.s32.totalorder %s22, 0
        %s231 = scalar_select %p230, %s22, 0
        %s232 = smul.addr %s231, 8
        %s233 = scalar_lea.vmem %s2, %s232
        %v234 = vld [vmem:[%s225] sm:$0xf]
        %v235 = vld [vmem:[%s229] sm:$0xff]
        %237 = vset.pattern.permute.xlu0 0
        %238 = vperm.xlu0 %237, %v235
        %v239 = vpop.permute.xlu0 %238
        %v241 = vlaneseq
        %v242 = vshrl.u32 %v241, 7
        %v243 = vsub.s32 0, %v242
        %v244 = vrot.slane %v234, %v243
        %v245 = vmul.f32 %v239, %v244
        %246 = vset.pattern.permute.xlu0 1
        %247 = vperm.xlu0 %246, %v235
        %v248 = vpop.permute.xlu0 %247
        %v250 = vlaneseq
        %v251 = vshrl.u32 %v250, 7
        %v252 = vsub.s32 1, %v251
        %v253 = vrot.slane %v234, %v252
        %v254 = vmul.f32 %v248, %v253
        %v255 = vadd.f32 %v245, %v254
        %256 = vset.pattern.permute.xlu0 2
        %257 = vperm.xlu0 %256, %v235
        %v258 = vpop.permute.xlu0 %257
        %v260 = vlaneseq
        %v261 = vshrl.u32 %v260, 7
        %v262 = vsub.s32 2, %v261
        %v263 = vrot.slane %v234, %v262
        %v264 = vmul.f32 %v258, %v263
        %v265 = vadd.f32 %v255, %v264
        %266 = vset.pattern.permute.xlu0 3
        %267 = vperm.xlu0 %266, %v235
        %v268 = vpop.permute.xlu0 %267
        %v270 = vlaneseq
        %v271 = vshrl.u32 %v270, 7
        %v272 = vsub.s32 3, %v271
        %v273 = vrot.slane %v234, %v272
        %v274 = vmul.f32 %v268, %v273
        %v275 = vadd.f32 %v265, %v274
        %v276 = vld [vmem:[%s233] sm:$0xff]
        %278 = vset.pattern.permute.xlu0 0
        %279 = vperm.xlu0 %278, %v276
        %v280 = vpop.permute.xlu0 %279
        %v282 = vadd.f32 %v275, %v280
        %vm283 = vcmask 130048
        %284 = vst.msk [vmem:[%s218] sm:$0xff] %vm283, %v282
        %s285 = sand.u32 %s128, 1
        %s286 = scalar_lea.sflag [#allocation3], %s285
        %s287 = sand.u32 %s128, 1
        %s288 = smul.addr %s287, 8
        %s289 = scalar_lea.vmem [#allocation2], %s288
        // Predicated region
        $region33: #{tpu_custom_call.1} parent=31 // pred_check
          %p290 = pneg %p138
        $region34: #{tpu_custom_call.1} parent=31 // pred_check_branch
          %292 = sbr.rel (%p290) target = $region36
        $region35: #{tpu_custom_call.1} parent=31 // pred_region
          %s294 = ssub.s32 128, 128
          %295 = vsyncadd %s286, %s294
          %s296 = sadd.s32 %s24, %s22
          %s297 = sadd.s32 %s296, %s23
          %s298 = smul.addr %s297, 128
          %s299 = scalar_lea.hbm %s3, %s298
          %s301 = sshll.u32 %s289, 4
          %s302 = int_to_ptr.vmem [resolvable:$true] %s301
          %304 = dma.vmem_to_hbm [thread:$0]  %s302, 128, %s299, %s286
        $region36: #{tpu_custom_call.1} parent=31 // pred_fallthru
          _
      $region32: #{tpu_custom_call.1} parent=5 // pred_fallthru
        _
      %p305 = scmp.le.s32.totalorder 2, %s12
      // Predicated region
      $region37: #{tpu_custom_call.1} parent=5 // pred_check
        %p306 = pneg %p305
      $region38: #{tpu_custom_call.1} parent=5 // pred_check_branch
        %308 = sbr.rel (%p306) target = $region40
      $region39: #{tpu_custom_call.1} parent=5 // pred_region
        %s309 = ssub.s32 %s12, 2
        // Predicated region
        $region41: #{tpu_custom_call.1} parent=39 // pred_check
          %p310 = pneg %p144
        $region42: #{tpu_custom_call.1} parent=39 // pred_check_branch
          %312 = sbr.rel (%p310) target = $region44
        $region43: #{tpu_custom_call.1} parent=39 // pred_region
          %s313 = sand.u32 %s129, 1
          %s314 = scalar_lea.sflag [#allocation3], %s313
          %s315 = sand.u32 %s129, 1
          %s316 = smul.addr %s315, 8
          %s317 = scalar_lea.vmem [#allocation2], %s316
          %318 = dma.done %s314, 128
        $region44: #{tpu_custom_call.1} parent=39 // pred_fallthru
          _
      $region40: #{tpu_custom_call.1} parent=5 // pred_fallthru
        _
    $region6: #{tpu_custom_call.1} parent=1 // loop_footer
      %s16 = sadd.s32 1, %s12
    $region7: #{tpu_custom_call.1} parent=1 // loop_footer_branch
      %11 = sbr.rel target = $region3
    $region8: #{tpu_custom_call.1} parent=1 // loop_exit
      _
    %319 = vsyncpa [#allocation3], 1
    %s320 = scalar_lea.sflag [#allocation3], 1
    %321 = vsyncpa %s320, 1

</llo_original>
